<compile_context>
chip_gen: v7x
topology: tpu7x:2x2x1
jax: 0.10.0
libtpu: 0.0.40
codegen_flags: <defaults>
</compile_context>

<pallas_src>
import functools
import numpy as np
import jax
import jax.numpy as jnp
from jax.experimental import pallas as pl
from jax.experimental.pallas import tpu as pltpu


# ----------------------------------------------------------------------------
# Pallas kernel: 4 bf16 MXU matmuls + (bf16|f32) elementwise, one output slab.
# ----------------------------------------------------------------------------
def mtl_kernel(
    x_ref,
    w1_ref, b1_ref,          # shared_block1 Linear
    w2_ref, b2_ref,          # shared_block2 Linear (BN1 folded in)
    wc1_ref, bc1_ref,        # fused stage-1 over [h | x]; cols = [total(64) | emissions(E)]
    w2c_ref, b2c_ref,        # fused stage-2 (block-diag); cols = [emissions(T) | total(32)]
    w3pad_ref, bt3_ref,      # total tail Linear(32,1) as zero-padded (1, T+32) row + bias
    out_ref,                 # (TB, T+1) = [emissions | total]
    *, act_dtype,
):
    f32 = jnp.float32
    bf16 = jnp.bfloat16

    xb = x_ref[...].astype(bf16)

    # ---- shared_block1: Linear -> SiLU (BN1 folded into w2/b2, dropout = id) ----
    h = jnp.dot(xb, w1_ref[...], preferred_element_type=f32) + b1_ref[...]
    h = h.astype(act_dtype)
    h = h * jax.nn.sigmoid(h)                                   # SiLU

    # ---- shared_block2: Linear -> SiLU (BN2 folded into fused stage-1) ----
    h = jnp.dot(h.astype(bf16), w2_ref[...], preferred_element_type=f32) + b2_ref[...]
    h = h.astype(act_dtype)
    h = h * jax.nn.sigmoid(h)

    # ---- fused head stage-1: single dot over [h | x] (h is one 128-lane tile) ----
    hx = jnp.concatenate([h.astype(bf16), xb], axis=1)
    z = jnp.dot(hx, wc1_ref[...], preferred_element_type=f32) + bc1_ref[...]
    # Both the emission heads and the total head apply GELU after (Linear+BN),
    # so one GELU over the whole fused slab is exact.
    z = jax.nn.gelu(z.astype(act_dtype), approximate=True)

    # ---- fused stage-2 (block-diagonal); output cols = [emissions(T) | total(32)] ----
    z2 = jnp.dot(z.astype(bf16), w2c_ref[...], preferred_element_type=f32) + b2c_ref[...]

    n_e = out_ref.shape[1] - 1
    e = z2[:, :n_e]                                             # emission logits (lane 0..T-1)

    # ---- total head tail: GELU -> (32,1) Linear done as VPU mul + lane reduce ----
    # w3pad is zero on the emission columns, so GELU over the full slab + masked
    # reduce equals gelu(total) @ wt3 exactly; no mid-lane-tile slice, no MXU.
    g = jax.nn.gelu(z2.astype(act_dtype), approximate=True).astype(f32)
    t = jnp.sum(g * w3pad_ref[...], axis=1, keepdims=True) + bt3_ref[...]

    # ---- single combined output store: [softplus(emissions) | softplus(total)] ----
    out = jnp.concatenate([jax.nn.softplus(e), jax.nn.softplus(t)], axis=1)
    out_ref[...] = out.astype(out_ref.dtype)


# ----------------------------------------------------------------------------
# Raw (PyTorch-equivalent) parameter construction.
# ----------------------------------------------------------------------------
def init_linear(key, fan_in, fan_out):
    k_w, k_b = jax.random.split(key)
    bound = 1.0 / np.sqrt(fan_in)
    w = jax.random.uniform(k_w, (fan_in, fan_out), jnp.float32, -bound, bound)
    b = jax.random.uniform(k_b, (fan_out,), jnp.float32, -bound, bound)
    return w, b


def bn_eval_scale_shift(num_features, eps=1e-5):
    # Freshly-initialized BatchNorm1d in eval mode:
    # gamma=1, beta=0, running_mean=0, running_var=1.
    gamma = jnp.ones((num_features,), jnp.float32)
    beta = jnp.zeros((num_features,), jnp.float32)
    mean = jnp.zeros((num_features,), jnp.float32)
    var = jnp.ones((num_features,), jnp.float32)
    scale = gamma / jnp.sqrt(var + eps)
    shift = beta - mean * scale
    return scale, shift


def build_raw_params(key, input_size, num_tasks, hidden_dims=(256, 128)):
    h0, h1 = hidden_dims
    keys = jax.random.split(key, 5 + 2 * num_tasks)
    p = {}
    p["w1"], p["b1"] = init_linear(keys[0], input_size, h0)
    p["s1"], p["t1"] = bn_eval_scale_shift(h0)
    p["w2"], p["b2"] = init_linear(keys[1], h0, h1)
    p["s2"], p["t2"] = bn_eval_scale_shift(h1)

    p["head_wa"], p["head_ba"] = [], []
    p["head_sa"], p["head_ta"] = [], []
    p["head_wb"], p["head_bb"] = [], []
    for task in range(num_tasks):
        wa, ba = init_linear(keys[5 + 2 * task], h1, 64)
        sa, ta = bn_eval_scale_shift(64)
        wb, bb = init_linear(keys[5 + 2 * task + 1], 64, 1)
        p["head_wa"].append(wa); p["head_ba"].append(ba)
        p["head_sa"].append(sa); p["head_ta"].append(ta)
        p["head_wb"].append(wb); p["head_bb"].append(bb)

    p["wt1"], p["bt1"] = init_linear(keys[2], h1 + input_size, 64)
    p["st1"], p["tt1"] = bn_eval_scale_shift(64)
    p["wt2"], p["bt2"] = init_linear(keys[3], 64, 32)
    p["st2"], p["tt2"] = bn_eval_scale_shift(32)
    p["wt3"], p["bt3"] = init_linear(keys[4], 32, 1)
    return p


# ----------------------------------------------------------------------------
# Fold BN into the Linears, fuse/pack the heads, cast MXU weights to bf16.
# ----------------------------------------------------------------------------
def fold_params(p, input_size, num_tasks, hidden_dims=(256, 128),
                weight_dtype=jnp.bfloat16):
    h0, h1 = hidden_dims
    T = num_tasks
    E = T * 64

    def row(v):
        return jnp.asarray(v, jnp.float32).reshape(1, -1)

    # shared_block1: BN1 comes after SiLU -> fold into block-2's Linear (input side).
    w1, b1 = p["w1"], p["b1"]
    w2 = p["s1"][:, None] * p["w2"]
    b2 = p["b2"] + p["t1"] @ p["w2"]

    # Emission stage-1: stack Linear(h1,64) over tasks; fold BN2 (input side)
    # and each head's BN(64) (output side).
    we1 = jnp.concatenate(p["head_wa"], axis=1)          # (h1, E)
    be1 = jnp.concatenate(p["head_ba"], axis=0)          # (E,)
    se = jnp.concatenate(p["head_sa"], axis=0)
    te = jnp.concatenate(p["head_ta"], axis=0)
    we1_f = p["s2"][:, None] * we1 * se[None, :]
    be1_f = (p["t2"] @ we1 + be1) * se + te

    # Total stage-1: split wt1 into h-part / identity(x)-part; fold BN2 (input
    # side, h-part only) and BN(64) (output side).
    wt1h = p["wt1"][:h1, :]
    wt1x = p["wt1"][h1:, :]
    st1, tt1 = p["st1"], p["tt1"]
    wt1h_f = p["s2"][:, None] * wt1h * st1[None, :]
    wt1x_f = wt1x * st1[None, :]
    bt1_f = (p["t2"] @ wt1h + p["bt1"]) * st1 + tt1

    # Single stacked stage-1 weight over rows = [h(h1) | x(in)],
    # columns = [total(64) | emissions(E)].
    wc1 = jnp.zeros((h1 + input_size, 64 + E), jnp.float32)
    wc1 = wc1.at[:h1, :64].set(wt1h_f)
    wc1 = wc1.at[:h1, 64:].set(we1_f)
    wc1 = wc1.at[h1:, :64].set(wt1x_f)
    bc1 = jnp.concatenate([bt1_f, be1_f], axis=0)                 # (64+E,)

    # Fused stage-2 (block-diagonal), output columns = [emissions(T) | total(32)].
    wt2_f = p["wt2"] * p["st2"][None, :]
    bt2_f = p["bt2"] * p["st2"] + p["tt2"]
    we2 = jnp.zeros((E, T), jnp.float32)
    be2 = jnp.zeros((T,), jnp.float32)
    for task in range(T):
        we2 = we2.at[task * 64:(task + 1) * 64, task].set(p["head_wb"][task][:, 0])
        be2 = be2.at[task].set(p["head_bb"][task][0])
    w2c = jnp.zeros((64 + E, T + 32), jnp.float32)
    w2c = w2c.at[:64, T:].set(wt2_f)
    w2c = w2c.at[64:, :T].set(we2)
    b2c = jnp.concatenate([be2, bt2_f], axis=0)                   # (T+32,)

    # Total tail Linear(32,1) as a zero-padded (T+32,) row for VPU mul + reduce.
    w3pad = jnp.concatenate([jnp.zeros((T,), jnp.float32), p["wt3"][:, 0]], axis=0)

    wd = weight_dtype
    return dict(
        w1=w1.astype(wd), b1=row(b1),
        w2=w2.astype(wd), b2=row(b2),
        wc1=wc1.astype(wd), bc1=row(bc1),
        w2c=w2c.astype(wd), b2c=row(b2c),
        w3pad=row(w3pad), bt3=row(p["bt3"]),
    )


# ----------------------------------------------------------------------------
# Wrapper: batch-tiled grid (padded, >=2 even steps for large B), one output.
# ----------------------------------------------------------------------------
_KERNEL_ARG_ORDER = ("w1", "b1", "w2", "b2", "wc1", "bc1", "w2c", "b2c",
                     "w3pad", "bt3")


def _round_up(n, m):
    return ((n + m - 1) // m) * m


def _choose_tiling(batch, cap=2048, split_threshold=1024):
    # Live VMEM per row is only a few KB of activations, so tiles up to ~2048
    # rows fit comfortably under the 32 MiB scoped limit (and v7x's 64 MiB
    # physical VMEM) while amortizing the ~0.35us/step grid overhead and giving
    # the MXU many LHS rows per weight push.  For large batches use an EVEN
    # number (>=2) of "parallel" steps so v7x's two TensorCores stay balanced;
    # the wrapper pads the batch up to grid*TB (no full-B fallback).
    if batch <= split_threshold:
        return batch, 1
    n_tiles = max(2, -(-batch // cap))
    if n_tiles % 2:
        n_tiles += 1
    tb = _round_up(-(-batch // n_tiles), 8)
    return tb, n_tiles


def _elementwise_dtype():
    # bf16 VPU/EUP exists on v6e/v7x; keep f32 elementwise math on v5e & older.
    try:
        kind = jax.devices()[0].device_kind.lower()
    except Exception:
        return jnp.float32
    if ("v6" in kind) or ("v7" in kind) or ("7x" in kind):
        return jnp.bfloat16
    return jnp.float32


@functools.partial(jax.jit, static_argnames=("num_tasks", "act_dtype"))
def _forward_impl(x, kp, num_tasks, act_dtype):
    B, D_in = x.shape
    TB, grid_n = _choose_tiling(B)
    B_pad = TB * grid_n
    if B_pad != B:
        x = jnp.pad(x, ((0, B_pad - B), (0, 0)))
    out_w = num_tasks + 1

    weight_args = [kp[name] for name in _KERNEL_ARG_ORDER]

    in_specs = [pl.BlockSpec((TB, D_in), lambda i: (i, 0))]
    in_specs += [pl.BlockSpec(w.shape, lambda i: (0, 0)) for w in weight_args]

    kernel = functools.partial(mtl_kernel, act_dtype=act_dtype)
    out = pl.pallas_call(
        kernel,
        grid=(grid_n,),
        in_specs=in_specs,
        out_specs=pl.BlockSpec((TB, out_w), lambda i: (i, 0)),
        out_shape=jax.ShapeDtypeStruct((B_pad, out_w), jnp.float32),
        compiler_params=pltpu.CompilerParams(
            dimension_semantics=("parallel",),
            vmem_limit_bytes=32 * 1024 * 1024,
        ),
    )(x, *weight_args)

    out = out[:B]
    emissions = out[:, :num_tasks]
    total = out[:, num_tasks:out_w]
    return emissions, total


def enhanced_multitask_forward(x, kp, num_tasks):
    return _forward_impl(x, kp, num_tasks=num_tasks,
                         act_dtype=_elementwise_dtype())


# ----------------------------------------------------------------------------
# Pure-JAX f32 reference implementing the PyTorch module exactly (eval mode).
# ----------------------------------------------------------------------------
def reference_forward(x, p, num_tasks):
    h = x @ p["w1"] + p["b1"]
    h = h * jax.nn.sigmoid(h)
    h = h * p["s1"] + p["t1"]
    h = h @ p["w2"] + p["b2"]
    h = h * jax.nn.sigmoid(h)
    h = h * p["s2"] + p["t2"]

    ems = []
    for task in range(num_tasks):
        a = h @ p["head_wa"][task] + p["head_ba"][task]
        a = a * p["head_sa"][task] + p["head_ta"][task]
        a = jax.nn.gelu(a, approximate=False)
        a = a @ p["head_wb"][task] + p["head_bb"][task]
        ems.append(jax.nn.softplus(a))
    emissions = jnp.concatenate(ems, axis=1)

    tf = jnp.concatenate([h, x], axis=1)
    v = tf @ p["wt1"] + p["bt1"]
    v = v * p["st1"] + p["tt1"]
    v = jax.nn.gelu(v, approximate=False)
    v = v @ p["wt2"] + p["bt2"]
    v = v * p["st2"] + p["tt2"]
    v = jax.nn.gelu(v, approximate=False)
    v = v @ p["wt3"] + p["bt3"]
    total = jax.nn.softplus(v)
    return emissions, total


if __name__ == "__main__":
    INPUT_SIZE = 32
    NUM_TASKS = 4
    BATCH = 8

    key = jax.random.PRNGKey(0)
    k_x, k_p = jax.random.split(key)
    x = jax.random.normal(k_x, (BATCH, INPUT_SIZE), jnp.float32)

    raw = build_raw_params(k_p, INPUT_SIZE, NUM_TASKS)
    kp = fold_params(raw, INPUT_SIZE, NUM_TASKS)

    emissions, total = enhanced_multitask_forward(x, kp, num_tasks=NUM_TASKS)
    jax.block_until_ready((emissions, total))

    e_ref, t_ref = reference_forward(x, raw, NUM_TASKS)
    assert emissions.shape == (BATCH, NUM_TASKS)
    assert total.shape == (BATCH, 1)
    # bf16 weights (+ bf16 elementwise math on v6e/v7x, tanh GELU) vs the exact
    # f32 reference -> loosened tolerance.
    tol = 4e-2 if _elementwise_dtype() is jnp.bfloat16 else 2e-2
    np.testing.assert_allclose(np.asarray(emissions), np.asarray(e_ref),
                               rtol=tol, atol=tol)
    np.testing.assert_allclose(np.asarray(total), np.asarray(t_ref),
                               rtol=tol, atol=tol)
    # TODO(synk): training-mode Dropout (stochastic masking) and batch-stat
    # BatchNorm are not implemented; this is the eval-mode forward.
    print("KERNEL_OK")
</pallas_src>

<mosaic_0001>
module attributes {stable_mosaic.version = 11 : i64} {
  func.func @mtl_kernel(%arg0: i32, %arg1: memref<8x32xf32, #tpu.memory_space<vmem>>, %arg2: memref<32x256xbf16, #tpu.memory_space<vmem>>, %arg3: memref<1x256xf32, #tpu.memory_space<vmem>>, %arg4: memref<256x128xbf16, #tpu.memory_space<vmem>>, %arg5: memref<1x128xf32, #tpu.memory_space<vmem>>, %arg6: memref<160x320xbf16, #tpu.memory_space<vmem>>, %arg7: memref<1x320xf32, #tpu.memory_space<vmem>>, %arg8: memref<320x36xbf16, #tpu.memory_space<vmem>>, %arg9: memref<1x36xf32, #tpu.memory_space<vmem>>, %arg10: memref<1x36xf32, #tpu.memory_space<vmem>>, %arg11: memref<1x1xf32, #tpu.memory_space<vmem>>, %arg12: memref<8x5xf32, #tpu.memory_space<vmem>>) attributes {dimension_semantics = [#tpu.dimension_semantics<parallel>], iteration_bounds = array<i64: 1>, scalar_prefetch = 0 : i64, scratch_operands = 0 : i64, tpu.core_type = #tpu.core_type<tc>, window_params = [{transform_indices = @transform_0, window_bounds = array<i64: 8, 32>}, {pipeline_mode = #tpu.pipeline_mode<synchronous>, transform_indices = @transform_1, window_bounds = array<i64: 32, 256>}, {pipeline_mode = #tpu.pipeline_mode<synchronous>, transform_indices = @transform_2, window_bounds = array<i64: 1, 256>}, {pipeline_mode = #tpu.pipeline_mode<synchronous>, transform_indices = @transform_3, window_bounds = array<i64: 256, 128>}, {pipeline_mode = #tpu.pipeline_mode<synchronous>, transform_indices = @transform_4, window_bounds = array<i64: 1, 128>}, {pipeline_mode = #tpu.pipeline_mode<synchronous>, transform_indices = @transform_5, window_bounds = array<i64: 160, 320>}, {pipeline_mode = #tpu.pipeline_mode<synchronous>, transform_indices = @transform_6, window_bounds = array<i64: 1, 320>}, {pipeline_mode = #tpu.pipeline_mode<synchronous>, transform_indices = @transform_7, window_bounds = array<i64: 320, 36>}, {pipeline_mode = #tpu.pipeline_mode<synchronous>, transform_indices = @transform_8, window_bounds = array<i64: 1, 36>}, {pipeline_mode = #tpu.pipeline_mode<synchronous>, transform_indices = @transform_9, window_bounds = array<i64: 1, 36>}, {pipeline_mode = #tpu.pipeline_mode<synchronous>, transform_indices = @transform_10, window_bounds = array<i64: 1, 1>}, {transform_indices = @transform_11, window_bounds = array<i64: 8, 5>}]} {
    %c0 = arith.constant 0 : index
    %c0_0 = arith.constant 0 : index
    %0 = vector.load %arg1[%c0, %c0_0] : memref<8x32xf32, #tpu.memory_space<vmem>>, vector<8x32xf32>
    %1 = arith.truncf %0 : vector<8x32xf32> to vector<8x32xbf16>
    %c0_1 = arith.constant 0 : index
    %c0_2 = arith.constant 0 : index
    %2 = vector.load %arg2[%c0_1, %c0_2] : memref<32x256xbf16, #tpu.memory_space<vmem>>, vector<32x256xbf16>
    %cst = arith.constant dense<0.000000e+00> : vector<8x256xf32>
    %3 = tpu.matmul %1, %2, %cst {dimension_numbers = #tpu.dot_dimension_numbers<[1], [0], [0], [1], [0, 0, 1, 1], [], []>} : vector<8x32xbf16>, vector<32x256xbf16>, vector<8x256xf32> -> vector<8x256xf32>
    %c0_3 = arith.constant 0 : index
    %c0_4 = arith.constant 0 : index
    %4 = vector.load %arg3[%c0_3, %c0_4] : memref<1x256xf32, #tpu.memory_space<vmem>>, vector<1x256xf32>
    %5 = vector.broadcast %4 : vector<1x256xf32> to vector<8x256xf32>
    %6 = arith.addf %3, %5 : vector<8x256xf32>
    %7 = arith.negf %6 : vector<8x256xf32>
    %8 = math.exp %7 : vector<8x256xf32>
    %cst_5 = arith.constant 1.000000e+00 : f32
    %9 = vector.broadcast %cst_5 : f32 to vector<8x256xf32>
    %10 = arith.addf %9, %8 : vector<8x256xf32>
    %11 = arith.divf %9, %10 : vector<8x256xf32>
    %12 = arith.mulf %6, %11 : vector<8x256xf32>
    %13 = arith.truncf %12 : vector<8x256xf32> to vector<8x256xbf16>
    %c0_6 = arith.constant 0 : index
    %c0_7 = arith.constant 0 : index
    %14 = vector.load %arg4[%c0_6, %c0_7] : memref<256x128xbf16, #tpu.memory_space<vmem>>, vector<256x128xbf16>
    %cst_8 = arith.constant dense<0.000000e+00> : vector<8x128xf32>
    %15 = tpu.matmul %13, %14, %cst_8 {dimension_numbers = #tpu.dot_dimension_numbers<[1], [0], [0], [1], [0, 0, 1, 1], [], []>} : vector<8x256xbf16>, vector<256x128xbf16>, vector<8x128xf32> -> vector<8x128xf32>
    %c0_9 = arith.constant 0 : index
    %c0_10 = arith.constant 0 : index
    %16 = vector.load %arg5[%c0_9, %c0_10] : memref<1x128xf32, #tpu.memory_space<vmem>>, vector<1x128xf32>
    %17 = vector.broadcast %16 : vector<1x128xf32> to vector<8x128xf32>
    %18 = arith.addf %15, %17 : vector<8x128xf32>
    %19 = arith.negf %18 : vector<8x128xf32>
    %20 = math.exp %19 : vector<8x128xf32>
    %cst_11 = arith.constant 1.000000e+00 : f32
    %21 = vector.broadcast %cst_11 : f32 to vector<8x128xf32>
    %22 = arith.addf %21, %20 : vector<8x128xf32>
    %23 = arith.divf %21, %22 : vector<8x128xf32>
    %24 = arith.mulf %18, %23 : vector<8x128xf32>
    %25 = arith.truncf %24 : vector<8x128xf32> to vector<8x128xbf16>
    %26 = tpu.concatenate %25, %1 in 1 : vector<8x128xbf16>, vector<8x32xbf16> -> vector<8x160xbf16>
    %c0_12 = arith.constant 0 : index
    %c0_13 = arith.constant 0 : index
    %27 = vector.load %arg6[%c0_12, %c0_13] : memref<160x320xbf16, #tpu.memory_space<vmem>>, vector<160x320xbf16>
    %cst_14 = arith.constant dense<0.000000e+00> : vector<8x320xf32>
    %28 = tpu.matmul %26, %27, %cst_14 {dimension_numbers = #tpu.dot_dimension_numbers<[1], [0], [0], [1], [0, 0, 1, 1], [], []>} : vector<8x160xbf16>, vector<160x320xbf16>, vector<8x320xf32> -> vector<8x320xf32>
    %c0_15 = arith.constant 0 : index
    %c0_16 = arith.constant 0 : index
    %29 = vector.load %arg7[%c0_15, %c0_16] : memref<1x320xf32, #tpu.memory_space<vmem>>, vector<1x320xf32>
    %30 = vector.broadcast %29 : vector<1x320xf32> to vector<8x320xf32>
    %31 = arith.addf %28, %30 : vector<8x320xf32>
    %32 = arith.mulf %31, %31 : vector<8x320xf32>
    %33 = arith.mulf %31, %32 : vector<8x320xf32>
    %cst_17 = arith.constant 4.471500e-02 : f32
    %34 = vector.broadcast %cst_17 : f32 to vector<8x320xf32>
    %35 = arith.mulf %34, %33 : vector<8x320xf32>
    %36 = arith.addf %31, %35 : vector<8x320xf32>
    %cst_18 = arith.constant 0.797884583 : f32
    %37 = vector.broadcast %cst_18 : f32 to vector<8x320xf32>
    %38 = arith.mulf %37, %36 : vector<8x320xf32>
    %39 = math.tanh %38 : vector<8x320xf32>
    %cst_19 = arith.constant 1.000000e+00 : f32
    %40 = vector.broadcast %cst_19 : f32 to vector<8x320xf32>
    %41 = arith.addf %40, %39 : vector<8x320xf32>
    %cst_20 = arith.constant 5.000000e-01 : f32
    %42 = vector.broadcast %cst_20 : f32 to vector<8x320xf32>
    %43 = arith.mulf %42, %41 : vector<8x320xf32>
    %44 = arith.mulf %31, %43 : vector<8x320xf32>
    %45 = arith.truncf %44 : vector<8x320xf32> to vector<8x320xbf16>
    %c0_21 = arith.constant 0 : index
    %c0_22 = arith.constant 0 : index
    %46 = vector.load %arg8[%c0_21, %c0_22] : memref<320x36xbf16, #tpu.memory_space<vmem>>, vector<320x36xbf16>
    %cst_23 = arith.constant dense<0.000000e+00> : vector<8x36xf32>
    %47 = tpu.matmul %45, %46, %cst_23 {dimension_numbers = #tpu.dot_dimension_numbers<[1], [0], [0], [1], [0, 0, 1, 1], [], []>} : vector<8x320xbf16>, vector<320x36xbf16>, vector<8x36xf32> -> vector<8x36xf32>
    %c0_24 = arith.constant 0 : index
    %c0_25 = arith.constant 0 : index
    %48 = vector.load %arg9[%c0_24, %c0_25] : memref<1x36xf32, #tpu.memory_space<vmem>>, vector<1x36xf32>
    %49 = vector.broadcast %48 : vector<1x36xf32> to vector<8x36xf32>
    %50 = arith.addf %47, %49 : vector<8x36xf32>
    %51 = vector.extract_strided_slice %50 {offsets = [0, 0], sizes = [8, 4], strides = [1, 1]} : vector<8x36xf32> to vector<8x4xf32>
    %52 = arith.mulf %50, %50 : vector<8x36xf32>
    %53 = arith.mulf %50, %52 : vector<8x36xf32>
    %cst_26 = arith.constant 4.471500e-02 : f32
    %54 = vector.broadcast %cst_26 : f32 to vector<8x36xf32>
    %55 = arith.mulf %54, %53 : vector<8x36xf32>
    %56 = arith.addf %50, %55 : vector<8x36xf32>
    %cst_27 = arith.constant 0.797884583 : f32
    %57 = vector.broadcast %cst_27 : f32 to vector<8x36xf32>
    %58 = arith.mulf %57, %56 : vector<8x36xf32>
    %59 = math.tanh %58 : vector<8x36xf32>
    %cst_28 = arith.constant 1.000000e+00 : f32
    %60 = vector.broadcast %cst_28 : f32 to vector<8x36xf32>
    %61 = arith.addf %60, %59 : vector<8x36xf32>
    %cst_29 = arith.constant 5.000000e-01 : f32
    %62 = vector.broadcast %cst_29 : f32 to vector<8x36xf32>
    %63 = arith.mulf %62, %61 : vector<8x36xf32>
    %64 = arith.mulf %50, %63 : vector<8x36xf32>
    %c0_30 = arith.constant 0 : index
    %c0_31 = arith.constant 0 : index
    %65 = vector.load %arg10[%c0_30, %c0_31] : memref<1x36xf32, #tpu.memory_space<vmem>>, vector<1x36xf32>
    %66 = vector.broadcast %65 : vector<1x36xf32> to vector<8x36xf32>
    %67 = arith.mulf %64, %66 : vector<8x36xf32>
    %cst_32 = arith.constant dense<0.000000e+00> : vector<8xf32>
    %68 = vector.multi_reduction <add>, %67, %cst_32 [1] : vector<8x36xf32> to vector<8xf32>
    %69 = vector.shape_cast %68 : vector<8xf32> to vector<8x1xf32>
    %c0_33 = arith.constant 0 : index
    %c0_34 = arith.constant 0 : index
    %70 = vector.load %arg11[%c0_33, %c0_34] : memref<1x1xf32, #tpu.memory_space<vmem>>, vector<1x1xf32>
    %71 = vector.broadcast %70 : vector<1x1xf32> to vector<8x1xf32>
    %72 = arith.addf %69, %71 : vector<8x1xf32>
    %cst_35 = arith.constant 0.000000e+00 : f32
    %73 = vector.broadcast %cst_35 : f32 to vector<8x4xf32>
    %74 = arith.maximumf %51, %73 : vector<8x4xf32>
    %75 = vector.broadcast %cst_35 : f32 to vector<8x4xf32>
    %76 = arith.subf %51, %75 : vector<8x4xf32>
    %77 = arith.cmpf one, %76, %76 : vector<8x4xf32>
    %78 = vector.broadcast %cst_35 : f32 to vector<8x4xf32>
    %79 = arith.addf %51, %78 : vector<8x4xf32>
    %80 = math.absf %76 : vector<8x4xf32>
    %cst_36 = arith.constant 0.000000e+00 : f32
    %81 = vector.broadcast %cst_36 : f32 to vector<8x4xf32>
    %82 = arith.subf %81, %80 : vector<8x4xf32>
    %83 = math.exp %82 : vector<8x4xf32>
    %84 = math.log1p %83 : vector<8x4xf32>
    %85 = arith.addf %74, %84 : vector<8x4xf32>
    %86 = arith.select %77, %79, %85 : vector<8x4xi1>, vector<8x4xf32>
    %cst_37 = arith.constant 0.000000e+00 : f32
    %87 = vector.broadcast %cst_37 : f32 to vector<8x1xf32>
    %88 = arith.maximumf %72, %87 : vector<8x1xf32>
    %89 = vector.broadcast %cst_37 : f32 to vector<8x1xf32>
    %90 = arith.subf %72, %89 : vector<8x1xf32>
    %91 = arith.cmpf one, %90, %90 : vector<8x1xf32>
    %92 = vector.broadcast %cst_37 : f32 to vector<8x1xf32>
    %93 = arith.addf %72, %92 : vector<8x1xf32>
    %94 = math.absf %90 : vector<8x1xf32>
    %cst_38 = arith.constant 0.000000e+00 : f32
    %95 = vector.broadcast %cst_38 : f32 to vector<8x1xf32>
    %96 = arith.subf %95, %94 : vector<8x1xf32>
    %97 = math.exp %96 : vector<8x1xf32>
    %98 = math.log1p %97 : vector<8x1xf32>
    %99 = arith.addf %88, %98 : vector<8x1xf32>
    %100 = arith.select %91, %93, %99 : vector<8x1xi1>, vector<8x1xf32>
    %101 = tpu.concatenate %86, %100 in 1 : vector<8x4xf32>, vector<8x1xf32> -> vector<8x5xf32>
    %c0_39 = arith.constant 0 : index
    %c0_40 = arith.constant 0 : index
    %102 = vector.load %arg12[%c0_39, %c0_40] : memref<8x5xf32, #tpu.memory_space<vmem>>, vector<8x5xf32>
    tpu.vector_store %arg12[%c0_39, %c0_40], %101 {strides = array<i32>} : memref<8x5xf32, #tpu.memory_space<vmem>>, vector<8x5xf32>,
    return
  }
  func.func @transform_0(%arg0: i32) -> (i32, i32) {
    %c0_i32 = arith.constant 0 : i32
    %c0_i32_0 = arith.constant 0 : i32
    return %arg0, %c0_i32 : i32, i32
  }
  func.func @transform_1(%arg0: i32) -> (i32, i32) {
    %c0_i32 = arith.constant 0 : i32
    %c0_i32_0 = arith.constant 0 : i32
    %c0_i32_1 = arith.constant 0 : i32
    return %c0_i32, %c0_i32_0 : i32, i32
  }
  func.func @transform_2(%arg0: i32) -> (i32, i32) {
    %c0_i32 = arith.constant 0 : i32
    %c0_i32_0 = arith.constant 0 : i32
    %c0_i32_1 = arith.constant 0 : i32
    return %c0_i32, %c0_i32_0 : i32, i32
  }
  func.func @transform_3(%arg0: i32) -> (i32, i32) {
    %c0_i32 = arith.constant 0 : i32
    %c0_i32_0 = arith.constant 0 : i32
    %c0_i32_1 = arith.constant 0 : i32
    return %c0_i32, %c0_i32_0 : i32, i32
  }
  func.func @transform_4(%arg0: i32) -> (i32, i32) {
    %c0_i32 = arith.constant 0 : i32
    %c0_i32_0 = arith.constant 0 : i32
    %c0_i32_1 = arith.constant 0 : i32
    return %c0_i32, %c0_i32_0 : i32, i32
  }
  func.func @transform_5(%arg0: i32) -> (i32, i32) {
    %c0_i32 = arith.constant 0 : i32
    %c0_i32_0 = arith.constant 0 : i32
    %c0_i32_1 = arith.constant 0 : i32
    return %c0_i32, %c0_i32_0 : i32, i32
  }
  func.func @transform_6(%arg0: i32) -> (i32, i32) {
    %c0_i32 = arith.constant 0 : i32
    %c0_i32_0 = arith.constant 0 : i32
    %c0_i32_1 = arith.constant 0 : i32
    return %c0_i32, %c0_i32_0 : i32, i32
  }
  func.func @transform_7(%arg0: i32) -> (i32, i32) {
    %c0_i32 = arith.constant 0 : i32
    %c0_i32_0 = arith.constant 0 : i32
    %c0_i32_1 = arith.constant 0 : i32
    return %c0_i32, %c0_i32_0 : i32, i32
  }
  func.func @transform_8(%arg0: i32) -> (i32, i32) {
    %c0_i32 = arith.constant 0 : i32
    %c0_i32_0 = arith.constant 0 : i32
    %c0_i32_1 = arith.constant 0 : i32
    return %c0_i32, %c0_i32_0 : i32, i32
  }
  func.func @transform_9(%arg0: i32) -> (i32, i32) {
    %c0_i32 = arith.constant 0 : i32
    %c0_i32_0 = arith.constant 0 : i32
    %c0_i32_1 = arith.constant 0 : i32
    return %c0_i32, %c0_i32_0 : i32, i32
  }
  func.func @transform_10(%arg0: i32) -> (i32, i32) {
    %c0_i32 = arith.constant 0 : i32
    %c0_i32_0 = arith.constant 0 : i32
    %c0_i32_1 = arith.constant 0 : i32
    return %c0_i32, %c0_i32_0 : i32, i32
  }
  func.func @transform_11(%arg0: i32) -> (i32, i32) {
    %c0_i32 = arith.constant 0 : i32
    %c0_i32_0 = arith.constant 0 : i32
    return %arg0, %c0_i32 : i32, i32
  }
}

</mosaic_0001>

<llo_original>
// kernel: _forward_impl.1
$region0: #{_forward_impl.1}
  #allocation0 [shape = 'u32[]', space=smem, size = 0x4, offset = 0x4, fixed_abs, tag = 'smem constant byte address 0x4 - core index']
  #allocation1 [shape = 'u32[144,128]{1,0:T(1,128)}', space=vmem, size = 0x12000, scoped, tag = 'internal scratch']
  #allocation2 [shape = 'f32[1,1]{1,0:T(1,128)S(1)}', space=vmem, size = 0x200, scoped, tag = 'scoped memory for _forward_impl.1']
  %s0 = inlined_call_operand.vmem [shape: f32[8,32], index: 0, kind: input, shape index: {}]
  %s1 = inlined_call_operand.hbm [shape: bf16[32,256], index: 1, kind: input, shape index: {}]
  %s2 = inlined_call_operand.vmem [shape: f32[1,256], index: 2, kind: input, shape index: {}]
  %s3 = inlined_call_operand.hbm [shape: bf16[256,128], index: 3, kind: input, shape index: {}]
  %s4 = inlined_call_operand.vmem [shape: f32[1,128], index: 4, kind: input, shape index: {}]
  %s5 = inlined_call_operand.vmem [shape: bf16[160,320], index: 5, kind: input, shape index: {}]
  %s6 = inlined_call_operand.vmem [shape: f32[1,320], index: 6, kind: input, shape index: {}]
  %s7 = inlined_call_operand.vmem [shape: bf16[320,36], index: 7, kind: input, shape index: {}]
  %s8 = inlined_call_operand.vmem [shape: f32[1,36], index: 8, kind: input, shape index: {}]
  %s9 = inlined_call_operand.vmem [shape: f32[1,36], index: 9, kind: input, shape index: {}]
  %s10 = inlined_call_operand.<no memory space> [shape: f32[1,1], index: 10, kind: input, shape index: {}]
  %s11 = inlined_call_operand.vmem [shape: f32[8,5], index: 11, kind: output, shape index: {}]
  %s12 = sld [smem:[#allocation0]]
  $region62: #{_forward_impl.1} parent=0
    _
  %s14 = ssub.s32 1, %s12
  %s15 = scalar_select 0, %s14, %s12
  %v16 = vstv %s10
  %17 = vst [vmem:[#allocation2] sm:$0x1] %v16
  $region1: #{_forward_impl.1} parent=0
    #allocation3 [shape = 'u8[16384]{0}', space=vmem, size = 0x4000, scoped, tag = 'input window, operand 1, single buffered']
    #allocation4 [shape = 's32[1]{0}', space=sflag, size = 0x4, scoped, tag = 'scoped memory for _forward_impl.1']
    #allocation5 [shape = 'u8[65536]{0}', space=vmem, size = 0x10000, scoped, tag = 'input window, operand 3, single buffered']
    #allocation6 [shape = 's32[1]{0}', space=sflag, size = 0x4, scoped, tag = 'scoped memory for _forward_impl.1']
    %18 = vsyncpa [#allocation4], 0
    %19 = vsyncpa [#allocation6], 0
    // Predicated region
    $region2: #{_forward_impl.1} parent=1 // pred_check
      _
    $region3: #{_forward_impl.1} parent=1 // pred_check_branch
      %21 = sbr.rel (0) target = $region5
    $region4: #{_forward_impl.1} parent=1 // pred_region
      _
    $region5: #{_forward_impl.1} parent=1 // pred_fallthru
      _
    // Predicated region
    $region6: #{_forward_impl.1} parent=1 // pred_check
      _
    $region7: #{_forward_impl.1} parent=1 // pred_check_branch
      %23 = sbr.rel (0) target = $region9
    $region8: #{_forward_impl.1} parent=1 // pred_region
      %s25 = ssub.s32 512, 512
      %26 = vsyncadd [#allocation4], %s25
      %s27 = sshll.u32 [#allocation3], 4
      %s28 = int_to_ptr.vmem [resolvable:$true] %s27
      %33 = dma.hbm_to_vmem [thread:$0]  %s1, 512, %s28, [#allocation4], 128, 128, 8
    $region9: #{_forward_impl.1} parent=1 // pred_fallthru
      _
    // Predicated region
    $region10: #{_forward_impl.1} parent=1 // pred_check
      _
    $region11: #{_forward_impl.1} parent=1 // pred_check_branch
      %35 = sbr.rel (0) target = $region13
    $region12: #{_forward_impl.1} parent=1 // pred_region
      _
    $region13: #{_forward_impl.1} parent=1 // pred_fallthru
      _
    // Predicated region
    $region14: #{_forward_impl.1} parent=1 // pred_check
      _
    $region15: #{_forward_impl.1} parent=1 // pred_check_branch
      %37 = sbr.rel (0) target = $region17
    $region16: #{_forward_impl.1} parent=1 // pred_region
      %s39 = ssub.s32 2048, 2048
      %40 = vsyncadd [#allocation6], %s39
      %s41 = sshll.u32 [#allocation5], 4
      %s42 = int_to_ptr.vmem [resolvable:$true] %s41
      %47 = dma.hbm_to_vmem [thread:$0]  %s3, 2048, %s42, [#allocation6], 64, 64, 4
    $region17: #{_forward_impl.1} parent=1 // pred_fallthru
      _
    // Predicated region
    $region18: #{_forward_impl.1} parent=1 // pred_check
      _
    $region19: #{_forward_impl.1} parent=1 // pred_check_branch
      %49 = sbr.rel (0) target = $region21
    $region20: #{_forward_impl.1} parent=1 // pred_region
      _
    $region21: #{_forward_impl.1} parent=1 // pred_fallthru
      _
    // Predicated region
    $region22: #{_forward_impl.1} parent=1 // pred_check
      _
    $region23: #{_forward_impl.1} parent=1 // pred_check_branch
      %51 = sbr.rel (0) target = $region25
    $region24: #{_forward_impl.1} parent=1 // pred_region
      _
    $region25: #{_forward_impl.1} parent=1 // pred_fallthru
      _
    // Predicated region
    $region26: #{_forward_impl.1} parent=1 // pred_check
      _
    $region27: #{_forward_impl.1} parent=1 // pred_check_branch
      %53 = sbr.rel (0) target = $region29
    $region28: #{_forward_impl.1} parent=1 // pred_region
      _
    $region29: #{_forward_impl.1} parent=1 // pred_fallthru
      _
    // Predicated region
    $region30: #{_forward_impl.1} parent=1 // pred_check
      _
    $region31: #{_forward_impl.1} parent=1 // pred_check_branch
      %55 = sbr.rel (0) target = $region33
    $region32: #{_forward_impl.1} parent=1 // pred_region
      _
    $region33: #{_forward_impl.1} parent=1 // pred_fallthru
      _
    // Predicated region
    $region34: #{_forward_impl.1} parent=1 // pred_check
      _
    $region35: #{_forward_impl.1} parent=1 // pred_check_branch
      %57 = sbr.rel (0) target = $region37
    $region36: #{_forward_impl.1} parent=1 // pred_region
      _
    $region37: #{_forward_impl.1} parent=1 // pred_fallthru
      _
    // Predicated region
    $region38: #{_forward_impl.1} parent=1 // pred_check
      _
    $region39: #{_forward_impl.1} parent=1 // pred_check_branch
      %59 = sbr.rel (0) target = $region41
    $region40: #{_forward_impl.1} parent=1 // pred_region
      _
    $region41: #{_forward_impl.1} parent=1 // pred_fallthru
      _
    // Predicated region
    $region42: #{_forward_impl.1} parent=1 // pred_check
      _
    $region43: #{_forward_impl.1} parent=1 // pred_check_branch
      %61 = sbr.rel (0) target = $region45
    $region44: #{_forward_impl.1} parent=1 // pred_region
      _
    $region45: #{_forward_impl.1} parent=1 // pred_fallthru
      _
    // Predicated region
    $region46: #{_forward_impl.1} parent=1 // pred_check
      _
    $region47: #{_forward_impl.1} parent=1 // pred_check_branch
      %63 = sbr.rel (0) target = $region49
    $region48: #{_forward_impl.1} parent=1 // pred_region
      %64 = dma.done [#allocation4], 512
    $region49: #{_forward_impl.1} parent=1 // pred_fallthru
      _
    // Predicated region
    $region50: #{_forward_impl.1} parent=1 // pred_check
      _
    $region51: #{_forward_impl.1} parent=1 // pred_check_branch
      %66 = sbr.rel (0) target = $region53
    $region52: #{_forward_impl.1} parent=1 // pred_region
      %67 = dma.done [#allocation6], 2048
    $region53: #{_forward_impl.1} parent=1 // pred_fallthru
      _
    %v69 = vld [vmem:[%s0] sm:$0xff]
    %v70 = vpack.c.bf16 %v69, %v69
    %v71 = vld [vmem:[#allocation3] sm:$0xff]
    %v72 = vld [vmem:[#allocation3 + $0x8] sm:$0xff]
    %v73 = vld [vmem:[#allocation3 + $0x10] sm:$0xff]
    %v74 = vld [vmem:[#allocation3 + $0x18] sm:$0xff]
    %v75 = vld [vmem:[%s2] sm:$0x3]
    %v77 = vlaneseq
    %v78 = vshrl.u32 %v77, 7
    %v79 = vsub.s32 0, %v78
    %v80 = vrot.slane %v75, %v79
    %v81 = vlaneseq
    %v82 = vshrl.u32 %v81, 7
    %v83 = vsub.s32 1, %v82
    %v84 = vrot.slane %v75, %v83
    %v91 = vunpack.c.l.b16 %v71
    %v92 = vunpack.c.h.b16 %v71
    %v93 = vunpack.c.l.b16 %v72
    %v94 = vunpack.c.h.b16 %v72
    %v95 = vunpack.c.l.b16 %v73
    %v96 = vunpack.c.h.b16 %v73
    %v97 = vunpack.c.l.b16 %v74
    %v98 = vunpack.c.h.b16 %v74
    %v99 = vpack.c.b16 %v93, %v91
    %v100 = vpack.c.b16 %v94, %v92
    %v101 = vpack.c.b16 %v97, %v95
    %v102 = vpack.c.b16 %v98, %v96
    %vm107 = vcmask 261120
    %v109 = vsel %vm107, %v70, 0
    %111 = vmatprep.subr.bf16.mxu0 %v100
    %112 = vmatpush1.bf16.msra.mxu0 %v99
    %113 = vmatprep.subr.bf16.mxu0 %v102
    %114 = vmatpush1.bf16.msra.mxu0 %v101
    %115 = vmatprep.subr.bf16.mxu0 0
    %116 = vmatpush1.bf16.msra.mxu0 0
    %117 = vmatprep.subr.bf16.mxu0 0
    %118 = vmatpush1.bf16.msra.mxu0 0
    %119 = vmatprep.subr.bf16.mxu0 0
    %120 = vmatpush1.bf16.msra.mxu0 0
    %121 = vmatprep.subr.bf16.mxu0 0
    %122 = vmatpush1.bf16.msra.mxu0 0
    %123 = vmatprep.subr.bf16.mxu0 0
    %124 = vmatpush1.bf16.msra.mxu0 0
    %125 = vmatprep.subr.bf16.mxu0 0
    %126 = vmatpush1.bf16.msra.mxu0 0
    %127 = vmatprep.subr.bf16.mxu0 0
    %128 = vmatpush1.bf16.msra.mxu0 0
    %129 = vmatprep.subr.bf16.mxu0 0
    %130 = vmatpush1.bf16.msra.mxu0 0
    %131 = vmatprep.subr.bf16.mxu0 0
    %132 = vmatpush1.bf16.msra.mxu0 0
    %133 = vmatprep.subr.bf16.mxu0 0
    %134 = vmatpush1.bf16.msra.mxu0 0
    %135 = vmatprep.subr.bf16.mxu0 0
    %136 = vmatpush1.bf16.msra.mxu0 0
    %137 = vmatprep.subr.bf16.mxu0 0
    %138 = vmatpush1.bf16.msra.mxu0 0
    %139 = vmatprep.subr.bf16.mxu0 0
    %140 = vmatpush1.bf16.msra.mxu0 0
    %141 = vmatprep.subr.bf16.mxu0 0
    %142 = vmatpush1.bf16.msra.mxu0 0
    %143 = vmatprep.mubr.bf16.mxu0 0
    %144 = vmatmul.mubr.bf16.gmra.mrb[0].mxu0 %v109
    %v145 = vpop.f32.mrb[0].mxu0
    %v146 = vadd.f32 %v80, %v145
    %v147 = vpop.f32.mrb[0].mxu0
    %v148 = vadd.f32 %v84, %v147
    %v149 = vpop.f32.mrb[0].mxu0
    %v150 = vpop.f32.mrb[0].mxu0
    %151 = vdwg.mxu0
    %v152 = vxor.u32 %v146, 2147483648
    %v153 = vxor.u32 %v148, 2147483648
    %v154 = vmul.f32 %v152, 1.442695
    %v155 = vpow.pop %v154
    %v156 = vmul.f32 %v153, 1.442695
    %v157 = vpow.pop %v156
    %v158 = vadd.f32 %v155, 1.0
    %v159 = vadd.f32 %v157, 1.0
    %v160 = vrcp.pop %v158
    %v161 = vmul.f32 1.0, %v160
    %v162 = vrcp.pop %v159
    %v163 = vmul.f32 1.0, %v162
    %v164 = vmul.f32 %v146, %v161
    %v165 = vmul.f32 %v148, %v163
    %v166 = vpack.c.bf16 %v164, %v164
    %v167 = vpack.c.bf16 %v165, %v165
    %v168 = vld [vmem:[#allocation5] sm:$0xf]
    %v169 = vld [vmem:[#allocation5 + $0x4] sm:$0xf]
    %v170 = vld [vmem:[#allocation5 + $0x8] sm:$0xf]
    %v171 = vld [vmem:[#allocation5 + $0xc] sm:$0xf]
    %v172 = vld [vmem:[#allocation5 + $0x10] sm:$0xf]
    %v173 = vld [vmem:[#allocation5 + $0x14] sm:$0xf]
    %v174 = vld [vmem:[#allocation5 + $0x18] sm:$0xf]
    %v175 = vld [vmem:[#allocation5 + $0x1c] sm:$0xf]
    %v176 = vld [vmem:[#allocation5 + $0x20] sm:$0xf]
    %v177 = vld [vmem:[#allocation5 + $0x24] sm:$0xf]
    %v178 = vld [vmem:[#allocation5 + $0x28] sm:$0xf]
    %v179 = vld [vmem:[#allocation5 + $0x2c] sm:$0xf]
    %v180 = vld [vmem:[#allocation5 + $0x30] sm:$0xf]
    %v181 = vld [vmem:[#allocation5 + $0x34] sm:$0xf]
    %v182 = vld [vmem:[#allocation5 + $0x38] sm:$0xf]
    %v183 = vld [vmem:[#allocation5 + $0x3c] sm:$0xf]
    %v184 = vld [vmem:[#allocation5 + $0x40] sm:$0xf]
    %v185 = vld [vmem:[#allocation5 + $0x44] sm:$0xf]
    %v186 = vld [vmem:[#allocation5 + $0x48] sm:$0xf]
    %v187 = vld [vmem:[#allocation5 + $0x4c] sm:$0xf]
    %v188 = vld [vmem:[#allocation5 + $0x50] sm:$0xf]
    %v189 = vld [vmem:[#allocation5 + $0x54] sm:$0xf]
    %v190 = vld [vmem:[#allocation5 + $0x58] sm:$0xf]
    %v191 = vld [vmem:[#allocation5 + $0x5c] sm:$0xf]
    %v192 = vld [vmem:[#allocation5 + $0x60] sm:$0xf]
    %v193 = vld [vmem:[#allocation5 + $0x64] sm:$0xf]
    %v194 = vld [vmem:[#allocation5 + $0x68] sm:$0xf]
    %v195 = vld [vmem:[#allocation5 + $0x6c] sm:$0xf]
    %v196 = vld [vmem:[#allocation5 + $0x70] sm:$0xf]
    %v197 = vld [vmem:[#allocation5 + $0x74] sm:$0xf]
    %v198 = vld [vmem:[#allocation5 + $0x78] sm:$0xf]
    %v199 = vld [vmem:[#allocation5 + $0x7c] sm:$0xf]
    %v200 = vld [vmem:[%s4] sm:$0x1]
    %v202 = vlaneseq
    %v203 = vshrl.u32 %v202, 7
    %v204 = vsub.s32 0, %v203
    %v205 = vrot.slane %v200, %v204
    %v239 = vunpack.c.l.b16 %v168
    %v240 = vunpack.c.l.b16 %v169
    %v241 = vunpack.c.l.b16 %v170
    %v242 = vunpack.c.l.b16 %v171
    %v243 = vunpack.c.l.b16 %v172
    %v244 = vunpack.c.l.b16 %v173
    %v245 = vunpack.c.l.b16 %v174
    %v246 = vunpack.c.l.b16 %v175
    %v247 = vunpack.c.l.b16 %v176
    %v248 = vunpack.c.l.b16 %v177
    %v249 = vunpack.c.l.b16 %v178
    %v250 = vunpack.c.l.b16 %v179
    %v251 = vunpack.c.l.b16 %v180
    %v252 = vunpack.c.l.b16 %v181
    %v253 = vunpack.c.l.b16 %v182
    %v254 = vunpack.c.l.b16 %v183
    %v255 = vunpack.c.l.b16 %v184
    %v256 = vunpack.c.l.b16 %v185
    %v257 = vunpack.c.l.b16 %v186
    %v258 = vunpack.c.l.b16 %v187
    %v259 = vunpack.c.l.b16 %v188
    %v260 = vunpack.c.l.b16 %v189
    %v261 = vunpack.c.l.b16 %v190
    %v262 = vunpack.c.l.b16 %v191
    %v263 = vunpack.c.l.b16 %v192
    %v264 = vunpack.c.l.b16 %v193
    %v265 = vunpack.c.l.b16 %v194
    %v266 = vunpack.c.l.b16 %v195
    %v267 = vunpack.c.l.b16 %v196
    %v268 = vunpack.c.l.b16 %v197
    %v269 = vunpack.c.l.b16 %v198
    %v270 = vunpack.c.l.b16 %v199
    %v271 = vpack.c.b16 %v240, %v239
    %v272 = vpack.c.b16 %v242, %v241
    %v273 = vpack.c.b16 %v244, %v243
    %v274 = vpack.c.b16 %v246, %v245
    %v275 = vpack.c.b16 %v248, %v247
    %v276 = vpack.c.b16 %v250, %v249
    %v277 = vpack.c.b16 %v252, %v251
    %v278 = vpack.c.b16 %v254, %v253
    %v279 = vpack.c.b16 %v256, %v255
    %v280 = vpack.c.b16 %v258, %v257
    %v281 = vpack.c.b16 %v260, %v259
    %v282 = vpack.c.b16 %v262, %v261
    %v283 = vpack.c.b16 %v264, %v263
    %v284 = vpack.c.b16 %v266, %v265
    %v285 = vpack.c.b16 %v268, %v267
    %v286 = vpack.c.b16 %v270, %v269
    %303 = vmatprep.subr.bf16.mxu0 0
    %304 = vmatpush1.bf16.msra.mxu0 %v271
    %305 = vmatprep.subr.bf16.mxu0 0
    %306 = vmatpush1.bf16.msra.mxu0 %v272
    %307 = vmatprep.subr.bf16.mxu0 0
    %308 = vmatpush1.bf16.msra.mxu0 %v273
    %309 = vmatprep.subr.bf16.mxu0 0
    %310 = vmatpush1.bf16.msra.mxu0 %v274
    %311 = vmatprep.subr.bf16.mxu0 0
    %312 = vmatpush1.bf16.msra.mxu0 %v275
    %313 = vmatprep.subr.bf16.mxu0 0
    %314 = vmatpush1.bf16.msra.mxu0 %v276
    %315 = vmatprep.subr.bf16.mxu0 0
    %316 = vmatpush1.bf16.msra.mxu0 %v277
    %317 = vmatprep.subr.bf16.mxu0 0
    %318 = vmatpush1.bf16.msra.mxu0 %v278
    %319 = vmatprep.subr.bf16.mxu0 0
    %320 = vmatpush1.bf16.msra.mxu0 %v279
    %321 = vmatprep.subr.bf16.mxu0 0
    %322 = vmatpush1.bf16.msra.mxu0 %v280
    %323 = vmatprep.subr.bf16.mxu0 0
    %324 = vmatpush1.bf16.msra.mxu0 %v281
    %325 = vmatprep.subr.bf16.mxu0 0
    %326 = vmatpush1.bf16.msra.mxu0 %v282
    %327 = vmatprep.subr.bf16.mxu0 0
    %328 = vmatpush1.bf16.msra.mxu0 %v283
    %329 = vmatprep.subr.bf16.mxu0 0
    %330 = vmatpush1.bf16.msra.mxu0 %v284
    %331 = vmatprep.subr.bf16.mxu0 0
    %332 = vmatpush1.bf16.msra.mxu0 %v285
    %333 = vmatprep.subr.bf16.mxu0 0
    %334 = vmatpush1.bf16.msra.mxu0 %v286
    %335 = vmatprep.mubr.bf16.mxu0 %v167
    %336 = vmatmul.mubr.bf16.gmra.mrb[0].mxu0 %v166
    %v337 = vpop.f32.mrb[0].mxu0
    %v338 = vadd.f32 %v205, %v337
    %v339 = vpop.f32.mrb[0].mxu0
    %v340 = vpop.f32.mrb[0].mxu0
    %v341 = vpop.f32.mrb[0].mxu0
    %342 = vdwg.mxu0
    %v343 = vxor.u32 %v338, 2147483648
    %v344 = vmul.f32 %v343, 1.442695
    %v345 = vpow.pop %v344
    %v346 = vadd.f32 %v345, 1.0
    %v347 = vrcp.pop %v346
    %v348 = vmul.f32 1.0, %v347
    %v349 = vmul.f32 %v338, %v348
    %v350 = vpack.c.bf16 %v349, %v349
    %v351 = vld [vmem:[%s5] sm:$0xff]
    %v352 = vld [vmem:[%s5 + $0x8] sm:$0xf]
    %v353 = vld [vmem:[%s5 + $0xc] sm:$0xff]
    %v354 = vld [vmem:[%s5 + $0x14] sm:$0xf]
    %v355 = vld [vmem:[%s5 + $0x18] sm:$0xff]
    %v356 = vld [vmem:[%s5 + $0x20] sm:$0xf]
    %v357 = vld [vmem:[%s5 + $0x24] sm:$0xff]
    %v358 = vld [vmem:[%s5 + $0x2c] sm:$0xf]
    %v359 = vld [vmem:[%s5 + $0x30] sm:$0xff]
    %v360 = vld [vmem:[%s5 + $0x38] sm:$0xf]
    %v361 = vld [vmem:[%s5 + $0x3c] sm:$0xff]
    %v362 = vld [vmem:[%s5 + $0x44] sm:$0xf]
    %v363 = vld [vmem:[%s5 + $0x48] sm:$0xff]
    %v364 = vld [vmem:[%s5 + $0x50] sm:$0xf]
    %v365 = vld [vmem:[%s5 + $0x54] sm:$0xff]
    %v366 = vld [vmem:[%s5 + $0x5c] sm:$0xf]
    %v367 = vld [vmem:[%s5 + $0x60] sm:$0xff]
    %v368 = vld [vmem:[%s5 + $0x68] sm:$0xf]
    %v369 = vld [vmem:[%s5 + $0x6c] sm:$0xff]
    %v370 = vld [vmem:[%s5 + $0x74] sm:$0xf]
    %v371 = vld [vmem:[%s5 + $0x78] sm:$0xff]
    %v372 = vld [vmem:[%s5 + $0x80] sm:$0xf]
    %v373 = vld [vmem:[%s5 + $0x84] sm:$0xff]
    %v374 = vld [vmem:[%s5 + $0x8c] sm:$0xf]
    %v375 = vld [vmem:[%s5 + $0x90] sm:$0xff]
    %v376 = vld [vmem:[%s5 + $0x98] sm:$0xf]
    %v377 = vld [vmem:[%s5 + $0x9c] sm:$0xff]
    %v378 = vld [vmem:[%s5 + $0xa4] sm:$0xf]
    %v379 = vld [vmem:[%s5 + $0xa8] sm:$0xff]
    %v380 = vld [vmem:[%s5 + $0xb0] sm:$0xf]
    %v381 = vld [vmem:[%s5 + $0xb4] sm:$0xff]
    %v382 = vld [vmem:[%s5 + $0xbc] sm:$0xf]
    %v383 = vld [vmem:[%s5 + $0xc0] sm:$0xff]
    %v384 = vld [vmem:[%s5 + $0xc8] sm:$0xf]
    %v385 = vld [vmem:[%s5 + $0xcc] sm:$0xff]
    %v386 = vld [vmem:[%s5 + $0xd4] sm:$0xf]
    %v387 = vld [vmem:[%s5 + $0xd8] sm:$0xff]
    %v388 = vld [vmem:[%s5 + $0xe0] sm:$0xf]
    %v389 = vld [vmem:[%s5 + $0xe4] sm:$0xff]
    %v390 = vld [vmem:[%s5 + $0xec] sm:$0xf]
    %v391 = vld [vmem:[%s6] sm:$0x7]
    %v393 = vlaneseq
    %v394 = vshrl.u32 %v393, 7
    %v395 = vsub.s32 0, %v394
    %v396 = vrot.slane %v391, %v395
    %v397 = vlaneseq
    %v398 = vshrl.u32 %v397, 7
    %v399 = vsub.s32 1, %v398
    %v400 = vrot.slane %v391, %v399
    %v401 = vlaneseq
    %v402 = vshrl.u32 %v401, 7
    %v403 = vsub.s32 2, %v402
    %v404 = vrot.slane %v391, %v403
    %v448 = vunpack.c.l.b16 %v351
    %v449 = vunpack.c.h.b16 %v351
    %v450 = vunpack.c.l.b16 %v352
    %v451 = vunpack.c.l.b16 %v353
    %v452 = vunpack.c.h.b16 %v353
    %v453 = vunpack.c.l.b16 %v354
    %v454 = vunpack.c.l.b16 %v355
    %v455 = vunpack.c.h.b16 %v355
    %v456 = vunpack.c.l.b16 %v356
    %v457 = vunpack.c.l.b16 %v357
    %v458 = vunpack.c.h.b16 %v357
    %v459 = vunpack.c.l.b16 %v358
    %v460 = vunpack.c.l.b16 %v359
    %v461 = vunpack.c.h.b16 %v359
    %v462 = vunpack.c.l.b16 %v360
    %v463 = vunpack.c.l.b16 %v361
    %v464 = vunpack.c.h.b16 %v361
    %v465 = vunpack.c.l.b16 %v362
    %v466 = vunpack.c.l.b16 %v363
    %v467 = vunpack.c.h.b16 %v363
    %v468 = vunpack.c.l.b16 %v364
    %v469 = vunpack.c.l.b16 %v365
    %v470 = vunpack.c.h.b16 %v365
    %v471 = vunpack.c.l.b16 %v366
    %v472 = vunpack.c.l.b16 %v367
    %v473 = vunpack.c.h.b16 %v367
    %v474 = vunpack.c.l.b16 %v368
    %v475 = vunpack.c.l.b16 %v369
    %v476 = vunpack.c.h.b16 %v369
    %v477 = vunpack.c.l.b16 %v370
    %v478 = vunpack.c.l.b16 %v371
    %v479 = vunpack.c.h.b16 %v371
    %v480 = vunpack.c.l.b16 %v372
    %v481 = vunpack.c.l.b16 %v373
    %v482 = vunpack.c.h.b16 %v373
    %v483 = vunpack.c.l.b16 %v374
    %v484 = vunpack.c.l.b16 %v375
    %v485 = vunpack.c.h.b16 %v375
    %v486 = vunpack.c.l.b16 %v376
    %v487 = vunpack.c.l.b16 %v377
    %v488 = vunpack.c.h.b16 %v377
    %v489 = vunpack.c.l.b16 %v378
    %v490 = vunpack.c.l.b16 %v379
    %v491 = vunpack.c.h.b16 %v379
    %v492 = vunpack.c.l.b16 %v380
    %v493 = vunpack.c.l.b16 %v381
    %v494 = vunpack.c.h.b16 %v381
    %v495 = vunpack.c.l.b16 %v382
    %v496 = vunpack.c.l.b16 %v383
    %v497 = vunpack.c.h.b16 %v383
    %v498 = vunpack.c.l.b16 %v384
    %v499 = vunpack.c.l.b16 %v385
    %v500 = vunpack.c.h.b16 %v385
    %v501 = vunpack.c.l.b16 %v386
    %v502 = vunpack.c.l.b16 %v387
    %v503 = vunpack.c.h.b16 %v387
    %v504 = vunpack.c.l.b16 %v388
    %v505 = vunpack.c.l.b16 %v389
    %v506 = vunpack.c.h.b16 %v389
    %v507 = vunpack.c.l.b16 %v390
    %v508 = vpack.c.b16 %v451, %v448
    %v509 = vpack.c.b16 %v452, %v449
    %v510 = vpack.c.b16 %v453, %v450
    %v511 = vpack.c.b16 %v457, %v454
    %v512 = vpack.c.b16 %v458, %v455
    %v513 = vpack.c.b16 %v459, %v456
    %v514 = vpack.c.b16 %v463, %v460
    %v515 = vpack.c.b16 %v464, %v461
    %v516 = vpack.c.b16 %v465, %v462
    %v517 = vpack.c.b16 %v469, %v466
    %v518 = vpack.c.b16 %v470, %v467
    %v519 = vpack.c.b16 %v471, %v468
    %v520 = vpack.c.b16 %v475, %v472
    %v521 = vpack.c.b16 %v476, %v473
    %v522 = vpack.c.b16 %v477, %v474
    %v523 = vpack.c.b16 %v481, %v478
    %v524 = vpack.c.b16 %v482, %v479
    %v525 = vpack.c.b16 %v483, %v480
    %v526 = vpack.c.b16 %v487, %v484
    %v527 = vpack.c.b16 %v488, %v485
    %v528 = vpack.c.b16 %v489, %v486
    %v529 = vpack.c.b16 %v493, %v490
    %v530 = vpack.c.b16 %v494, %v491
    %v531 = vpack.c.b16 %v495, %v492
    %v532 = vpack.c.b16 %v499, %v496
    %v533 = vpack.c.b16 %v500, %v497
    %v534 = vpack.c.b16 %v501, %v498
    %v535 = vpack.c.b16 %v505, %v502
    %v536 = vpack.c.b16 %v506, %v503
    %v537 = vpack.c.b16 %v507, %v504
    %568 = vmatprep.subr.bf16.mxu0 %v509
    %569 = vmatpush1.bf16.msra.mxu0 %v508
    %570 = vmatprep.subr.bf16.mxu0 %v512
    %571 = vmatpush1.bf16.msra.mxu0 %v511
    %572 = vmatprep.subr.bf16.mxu0 %v515
    %573 = vmatpush1.bf16.msra.mxu0 %v514
    %574 = vmatprep.subr.bf16.mxu0 %v518
    %575 = vmatpush1.bf16.msra.mxu0 %v517
    %576 = vmatprep.subr.bf16.mxu0 %v521
    %577 = vmatpush1.bf16.msra.mxu0 %v520
    %578 = vmatprep.subr.bf16.mxu0 %v524
    %579 = vmatpush1.bf16.msra.mxu0 %v523
    %580 = vmatprep.subr.bf16.mxu0 %v527
    %581 = vmatpush1.bf16.msra.mxu0 %v526
    %582 = vmatprep.subr.bf16.mxu0 %v530
    %583 = vmatpush1.bf16.msra.mxu0 %v529
    %584 = vmatprep.subr.bf16.mxu0 %v533
    %585 = vmatpush1.bf16.msra.mxu0 %v532
    %586 = vmatprep.subr.bf16.mxu0 %v536
    %587 = vmatpush1.bf16.msra.mxu0 %v535
    %588 = vmatprep.subr.bf16.mxu0 0
    %589 = vmatpush1.bf16.msra.mxu0 0
    %590 = vmatprep.subr.bf16.mxu0 0
    %591 = vmatpush1.bf16.msra.mxu0 0
    %592 = vmatprep.subr.bf16.mxu0 0
    %593 = vmatpush1.bf16.msra.mxu0 0
    %594 = vmatprep.subr.bf16.mxu0 0
    %595 = vmatpush1.bf16.msra.mxu0 0
    %596 = vmatprep.subr.bf16.mxu0 0
    %597 = vmatpush1.bf16.msra.mxu0 0
    %598 = vmatprep.subr.bf16.mxu0 0
    %599 = vmatpush1.bf16.msra.mxu0 0
    %600 = vmatprep.mubr.bf16.mxu0 %v109
    %601 = vmatmul.mubr.bf16.gmra.mrb[0].mxu0 %v350
    %v602 = vpop.f32.mrb[0].mxu0
    %v603 = vadd.f32 %v396, %v602
    %v604 = vpop.f32.mrb[0].mxu0
    %v605 = vadd.f32 %v400, %v604
    %v606 = vpop.f32.mrb[0].mxu0
    %v607 = vpop.f32.mrb[0].mxu0
    %608 = vdwg.mxu0
    %609 = vmatprep.subr.bf16.mxu0 0
    %610 = vmatpush1.bf16.msra.mxu0 %v510
    %611 = vmatprep.subr.bf16.mxu0 0
    %612 = vmatpush1.bf16.msra.mxu0 %v513
    %613 = vmatprep.subr.bf16.mxu0 0
    %614 = vmatpush1.bf16.msra.mxu0 %v516
    %615 = vmatprep.subr.bf16.mxu0 0
    %616 = vmatpush1.bf16.msra.mxu0 %v519
    %617 = vmatprep.subr.bf16.mxu0 0
    %618 = vmatpush1.bf16.msra.mxu0 %v522
    %619 = vmatprep.subr.bf16.mxu0 0
    %620 = vmatpush1.bf16.msra.mxu0 %v525
    %621 = vmatprep.subr.bf16.mxu0 0
    %622 = vmatpush1.bf16.msra.mxu0 %v528
    %623 = vmatprep.subr.bf16.mxu0 0
    %624 = vmatpush1.bf16.msra.mxu0 %v531
    %625 = vmatprep.subr.bf16.mxu0 0
    %626 = vmatpush1.bf16.msra.mxu0 %v534
    %627 = vmatprep.subr.bf16.mxu0 0
    %628 = vmatpush1.bf16.msra.mxu0 %v537
    %629 = vmatprep.subr.bf16.mxu0 0
    %630 = vmatpush1.bf16.msra.mxu0 0
    %631 = vmatprep.subr.bf16.mxu0 0
    %632 = vmatpush1.bf16.msra.mxu0 0
    %633 = vmatprep.subr.bf16.mxu0 0
    %634 = vmatpush1.bf16.msra.mxu0 0
    %635 = vmatprep.subr.bf16.mxu0 0
    %636 = vmatpush1.bf16.msra.mxu0 0
    %637 = vmatprep.subr.bf16.mxu0 0
    %638 = vmatpush1.bf16.msra.mxu0 0
    %639 = vmatprep.subr.bf16.mxu0 0
    %640 = vmatpush1.bf16.msra.mxu0 0
    %641 = vmatprep.mubr.bf16.mxu0 %v109
    %642 = vmatmul.mubr.bf16.gmra.mrb[0].mxu0 %v350
    %v643 = vpop.f32.mrb[0].mxu0
    %v644 = vadd.f32 %v404, %v643
    %v645 = vpop.f32.mrb[0].mxu0
    %v646 = vpop.f32.mrb[0].mxu0
    %v647 = vpop.f32.mrb[0].mxu0
    %648 = vdwg.mxu0
    %v649 = vmul.f32 %v603, %v603
    %v650 = vmul.f32 %v605, %v605
    %v651 = vmul.f32 %v644, %v644
    %v652 = vmul.f32 %v603, %v649
    %v653 = vmul.f32 %v605, %v650
    %v654 = vmul.f32 %v644, %v651
    %v655 = vmul.f32 %v652, 0.044715
    %v656 = vmul.f32 %v653, 0.044715
    %v657 = vmul.f32 %v654, 0.044715
    %v658 = vadd.f32 %v603, %v655
    %v659 = vadd.f32 %v605, %v656
    %v660 = vadd.f32 %v644, %v657
    %v661 = vmul.f32 %v658, 0.7978846
    %v662 = vmul.f32 %v659, 0.7978846
    %v663 = vmul.f32 %v660, 0.7978846
    %v664 = vtanh.pop %v661
    %v665 = vtanh.pop %v662
    %v666 = vtanh.pop %v663
    %v667 = vadd.f32 %v664, 1.0
    %v668 = vadd.f32 %v665, 1.0
    %v669 = vadd.f32 %v666, 1.0
    %v670 = vmul.f32 %v667, 0.5
    %v671 = vmul.f32 %v668, 0.5
    %v672 = vmul.f32 %v669, 0.5
    %v673 = vmul.f32 %v603, %v670
    %v674 = vmul.f32 %v605, %v671
    %v675 = vmul.f32 %v644, %v672
    %v676 = vpack.c.bf16 %v673, %v673
    %v677 = vpack.c.bf16 %v674, %v674
    %v678 = vpack.c.bf16 %v675, %v675
    %v679 = vld [vmem:[%s7] sm:$0xf]
    %v680 = vld [vmem:[%s7 + $0x4] sm:$0xf]
    %v681 = vld [vmem:[%s7 + $0x8] sm:$0xf]
    %v682 = vld [vmem:[%s7 + $0xc] sm:$0xf]
    %v683 = vld [vmem:[%s7 + $0x10] sm:$0xf]
    %v684 = vld [vmem:[%s7 + $0x14] sm:$0xf]
    %v685 = vld [vmem:[%s7 + $0x18] sm:$0xf]
    %v686 = vld [vmem:[%s7 + $0x1c] sm:$0xf]
    %v687 = vld [vmem:[%s7 + $0x20] sm:$0xf]
    %v688 = vld [vmem:[%s7 + $0x24] sm:$0xf]
    %v689 = vld [vmem:[%s7 + $0x28] sm:$0xf]
    %v690 = vld [vmem:[%s7 + $0x2c] sm:$0xf]
    %v691 = vld [vmem:[%s7 + $0x30] sm:$0xf]
    %v692 = vld [vmem:[%s7 + $0x34] sm:$0xf]
    %v693 = vld [vmem:[%s7 + $0x38] sm:$0xf]
    %v694 = vld [vmem:[%s7 + $0x3c] sm:$0xf]
    %v695 = vld [vmem:[%s7 + $0x40] sm:$0xf]
    %v696 = vld [vmem:[%s7 + $0x44] sm:$0xf]
    %v697 = vld [vmem:[%s7 + $0x48] sm:$0xf]
    %v698 = vld [vmem:[%s7 + $0x4c] sm:$0xf]
    %v699 = vld [vmem:[%s7 + $0x50] sm:$0xf]
    %v700 = vld [vmem:[%s7 + $0x54] sm:$0xf]
    %v701 = vld [vmem:[%s7 + $0x58] sm:$0xf]
    %v702 = vld [vmem:[%s7 + $0x5c] sm:$0xf]
    %v703 = vld [vmem:[%s7 + $0x60] sm:$0xf]
    %v704 = vld [vmem:[%s7 + $0x64] sm:$0xf]
    %v705 = vld [vmem:[%s7 + $0x68] sm:$0xf]
    %v706 = vld [vmem:[%s7 + $0x6c] sm:$0xf]
    %v707 = vld [vmem:[%s7 + $0x70] sm:$0xf]
    %v708 = vld [vmem:[%s7 + $0x74] sm:$0xf]
    %v709 = vld [vmem:[%s7 + $0x78] sm:$0xf]
    %v710 = vld [vmem:[%s7 + $0x7c] sm:$0xf]
    %v711 = vld [vmem:[%s7 + $0x80] sm:$0xf]
    %v712 = vld [vmem:[%s7 + $0x84] sm:$0xf]
    %v713 = vld [vmem:[%s7 + $0x88] sm:$0xf]
    %v714 = vld [vmem:[%s7 + $0x8c] sm:$0xf]
    %v715 = vld [vmem:[%s7 + $0x90] sm:$0xf]
    %v716 = vld [vmem:[%s7 + $0x94] sm:$0xf]
    %v717 = vld [vmem:[%s7 + $0x98] sm:$0xf]
    %v718 = vld [vmem:[%s7 + $0x9c] sm:$0xf]
    %v719 = vld [vmem:[%s8] sm:$0x1]
    %v721 = vlaneseq
    %v722 = vshrl.u32 %v721, 7
    %v723 = vsub.s32 0, %v722
    %v724 = vrot.slane %v719, %v723
    %v766 = vunpack.c.l.b16 %v679
    %v767 = vunpack.c.l.b16 %v680
    %v768 = vunpack.c.l.b16 %v681
    %v769 = vunpack.c.l.b16 %v682
    %v770 = vunpack.c.l.b16 %v683
    %v771 = vunpack.c.l.b16 %v684
    %v772 = vunpack.c.l.b16 %v685
    %v773 = vunpack.c.l.b16 %v686
    %v774 = vunpack.c.l.b16 %v687
    %v775 = vunpack.c.l.b16 %v688
    %v776 = vunpack.c.l.b16 %v689
    %v777 = vunpack.c.l.b16 %v690
    %v778 = vunpack.c.l.b16 %v691
    %v779 = vunpack.c.l.b16 %v692
    %v780 = vunpack.c.l.b16 %v693
    %v781 = vunpack.c.l.b16 %v694
    %v782 = vunpack.c.l.b16 %v695
    %v783 = vunpack.c.l.b16 %v696
    %v784 = vunpack.c.l.b16 %v697
    %v785 = vunpack.c.l.b16 %v698
    %v786 = vunpack.c.l.b16 %v699
    %v787 = vunpack.c.l.b16 %v700
    %v788 = vunpack.c.l.b16 %v701
    %v789 = vunpack.c.l.b16 %v702
    %v790 = vunpack.c.l.b16 %v703
    %v791 = vunpack.c.l.b16 %v704
    %v792 = vunpack.c.l.b16 %v705
    %v793 = vunpack.c.l.b16 %v706
    %v794 = vunpack.c.l.b16 %v707
    %v795 = vunpack.c.l.b16 %v708
    %v796 = vunpack.c.l.b16 %v709
    %v797 = vunpack.c.l.b16 %v710
    %v798 = vunpack.c.l.b16 %v711
    %v799 = vunpack.c.l.b16 %v712
    %v800 = vunpack.c.l.b16 %v713
    %v801 = vunpack.c.l.b16 %v714
    %v802 = vunpack.c.l.b16 %v715
    %v803 = vunpack.c.l.b16 %v716
    %v804 = vunpack.c.l.b16 %v717
    %v805 = vunpack.c.l.b16 %v718
    %v806 = vpack.c.b16 %v767, %v766
    %v807 = vpack.c.b16 %v769, %v768
    %v808 = vpack.c.b16 %v771, %v770
    %v809 = vpack.c.b16 %v773, %v772
    %v810 = vpack.c.b16 %v775, %v774
    %v811 = vpack.c.b16 %v777, %v776
    %v812 = vpack.c.b16 %v779, %v778
    %v813 = vpack.c.b16 %v781, %v780
    %v814 = vpack.c.b16 %v783, %v782
    %v815 = vpack.c.b16 %v785, %v784
    %v816 = vpack.c.b16 %v787, %v786
    %v817 = vpack.c.b16 %v789, %v788
    %v818 = vpack.c.b16 %v791, %v790
    %v819 = vpack.c.b16 %v793, %v792
    %v820 = vpack.c.b16 %v795, %v794
    %v821 = vpack.c.b16 %v797, %v796
    %v822 = vpack.c.b16 %v799, %v798
    %v823 = vpack.c.b16 %v801, %v800
    %v824 = vpack.c.b16 %v803, %v802
    %v825 = vpack.c.b16 %v805, %v804
    %vm846 = vcmask 523264
    %v848 = vsel %vm846, %v678, 0
    %850 = vmatprep.subr.bf16.mxu0 0
    %851 = vmatpush1.bf16.msra.mxu0 %v806
    %852 = vmatprep.subr.bf16.mxu0 0
    %853 = vmatpush1.bf16.msra.mxu0 %v807
    %854 = vmatprep.subr.bf16.mxu0 0
    %855 = vmatpush1.bf16.msra.mxu0 %v808
    %856 = vmatprep.subr.bf16.mxu0 0
    %857 = vmatpush1.bf16.msra.mxu0 %v809
    %858 = vmatprep.subr.bf16.mxu0 0
    %859 = vmatpush1.bf16.msra.mxu0 %v810
    %860 = vmatprep.subr.bf16.mxu0 0
    %861 = vmatpush1.bf16.msra.mxu0 %v811
    %862 = vmatprep.subr.bf16.mxu0 0
    %863 = vmatpush1.bf16.msra.mxu0 %v812
    %864 = vmatprep.subr.bf16.mxu0 0
    %865 = vmatpush1.bf16.msra.mxu0 %v813
    %866 = vmatprep.subr.bf16.mxu0 0
    %867 = vmatpush1.bf16.msra.mxu0 %v814
    %868 = vmatprep.subr.bf16.mxu0 0
    %869 = vmatpush1.bf16.msra.mxu0 %v815
    %870 = vmatprep.subr.bf16.mxu0 0
    %871 = vmatpush1.bf16.msra.mxu0 %v816
    %872 = vmatprep.subr.bf16.mxu0 0
    %873 = vmatpush1.bf16.msra.mxu0 %v817
    %874 = vmatprep.subr.bf16.mxu0 0
    %875 = vmatpush1.bf16.msra.mxu0 %v818
    %876 = vmatprep.subr.bf16.mxu0 0
    %877 = vmatpush1.bf16.msra.mxu0 %v819
    %878 = vmatprep.subr.bf16.mxu0 0
    %879 = vmatpush1.bf16.msra.mxu0 %v820
    %880 = vmatprep.subr.bf16.mxu0 0
    %881 = vmatpush1.bf16.msra.mxu0 %v821
    %882 = vmatprep.mubr.bf16.mxu0 %v677
    %883 = vmatmul.mubr.bf16.gmra.mrb[0].mxu0 %v676
    %v884 = vpop.f32.mrb[0].mxu0
    %v885 = vadd.f32 %v724, %v884
    %v886 = vpop.f32.mrb[0].mxu0
    %v887 = vpop.f32.mrb[0].mxu0
    %v888 = vpop.f32.mrb[0].mxu0
    %889 = vdwg.mxu0
    %890 = vmatprep.subr.bf16.mxu0 0
    %891 = vmatpush1.bf16.msra.mxu0 %v822
    %892 = vmatprep.subr.bf16.mxu0 0
    %893 = vmatpush1.bf16.msra.mxu0 %v823
    %894 = vmatprep.subr.bf16.mxu0 0
    %895 = vmatpush1.bf16.msra.mxu0 %v824
    %896 = vmatprep.subr.bf16.mxu0 0
    %897 = vmatpush1.bf16.msra.mxu0 %v825
    %898 = vmatprep.subr.bf16.mxu0 0
    %899 = vmatpush1.bf16.msra.mxu0 0
    %900 = vmatprep.subr.bf16.mxu0 0
    %901 = vmatpush1.bf16.msra.mxu0 0
    %902 = vmatprep.subr.bf16.mxu0 0
    %903 = vmatpush1.bf16.msra.mxu0 0
    %904 = vmatprep.subr.bf16.mxu0 0
    %905 = vmatpush1.bf16.msra.mxu0 0
    %906 = vmatprep.subr.bf16.mxu0 0
    %907 = vmatpush1.bf16.msra.mxu0 0
    %908 = vmatprep.subr.bf16.mxu0 0
    %909 = vmatpush1.bf16.msra.mxu0 0
    %910 = vmatprep.subr.bf16.mxu0 0
    %911 = vmatpush1.bf16.msra.mxu0 0
    %912 = vmatprep.subr.bf16.mxu0 0
    %913 = vmatpush1.bf16.msra.mxu0 0
    %914 = vmatprep.subr.bf16.mxu0 0
    %915 = vmatpush1.bf16.msra.mxu0 0
    %916 = vmatprep.subr.bf16.mxu0 0
    %917 = vmatpush1.bf16.msra.mxu0 0
    %918 = vmatprep.subr.bf16.mxu0 0
    %919 = vmatpush1.bf16.msra.mxu0 0
    %920 = vmatprep.subr.bf16.mxu0 0
    %921 = vmatpush1.bf16.msra.mxu0 0
    %922 = vmatprep.mubr.bf16.mxu0 0
    %923 = vmatmul.mubr.bf16.gmra.mrb[0].mxu0 %v848
    %v924 = vpop.f32.mrb[0].mxu0
    %v925 = vadd.f32 %v885, %v924
    %v926 = vpop.f32.mrb[0].mxu0
    %v927 = vpop.f32.mrb[0].mxu0
    %v928 = vpop.f32.mrb[0].mxu0
    %929 = vdwg.mxu0
    %v930 = vmul.f32 %v925, %v925
    %v931 = vmul.f32 %v925, %v930
    %v932 = vmul.f32 %v931, 0.044715
    %v933 = vadd.f32 %v925, %v932
    %v934 = vmul.f32 %v933, 0.7978846
    %v935 = vtanh.pop %v934
    %v936 = vadd.f32 %v935, 1.0
    %v937 = vmul.f32 %v936, 0.5
    %v938 = vmul.f32 %v925, %v937
    %v939 = vld [vmem:[%s9] sm:$0x1]
    %v941 = vlaneseq
    %v942 = vshrl.u32 %v941, 7
    %v943 = vsub.s32 0, %v942
    %v944 = vrot.slane %v939, %v943
    %v946 = vmul.f32 %v938, %v944
    %vm947 = vcmask 293888
    %v948 = vsel %vm947, %v946, 0.0
    %949 = vadd.xlane.f32.xlu0 %v948
    %v950 = vpop.xlane.xlu0 %949
    %v951 = vld [vmem:[#allocation2] sm:$0x1]
    %v953 = vlaneseq
    %v954 = vshrl.u32 %v953, 7
    %v955 = vsub.s32 0, %v954
    %v956 = vrot.slane %v951, %v955
    %v958 = vadd.f32 %v950, %v956
    %v959 = vmax.f32 %v925, 0.0
    %vm960 = vcmp.ne.f32.partialorder %v925, %v925
    %v961 = vadd.f32 %v925, 0.0
    %v962 = vand.u32 2147483647, %v925
    %v963 = vsub.f32 0.0, %v962
    %v964 = vmul.f32 %v963, 1.442695
    %v965 = vpow.pop %v964
    %v966 = vadd.f32 %v965, 1.0
    %v967 = vlog2.pop %v966
    %v968 = vmul.f32 %v967, 0.6931472
    %v969 = vmul.f32 -0.5, %v965
    %v970 = vadd.f32 %v969, 1.0
    %v971 = vmul.f32 %v970, %v965
    %v972 = vand.u32 2147483647, %v965
    %vm973 = vcmp.lt.f32.partialorder %v972, 0.0004427343
    %v974 = vsel %vm973, %v971, %v968
    %v975 = vadd.f32 %v959, %v974
    %v976 = vsel %vm960, %v961, %v975
    %v977 = vmax.f32 %v958, 0.0
    %vm978 = vcmp.ne.f32.partialorder %v958, %v958
    %v979 = vadd.f32 %v958, 0.0
    %v980 = vand.u32 2147483647, %v958
    %v981 = vsub.f32 0.0, %v980
    %v982 = vmul.f32 %v981, 1.442695
    %v983 = vpow.pop %v982
    %v984 = vadd.f32 %v983, 1.0
    %v985 = vlog2.pop %v984
    %v986 = vmul.f32 %v985, 0.6931472
    %v987 = vmul.f32 -0.5, %v983
    %v988 = vadd.f32 %v987, 1.0
    %v989 = vmul.f32 %v988, %v983
    %v990 = vand.u32 2147483647, %v983
    %vm991 = vcmp.lt.f32.partialorder %v990, 0.0004427343
    %v992 = vsel %vm991, %v989, %v986
    %v993 = vadd.f32 %v977, %v992
    %v994 = vsel %vm978, %v979, %v993
    %996 = vrot.lane.b32.xlu0 %v994, 4
    %v997 = vpop.permute.xlu0 %996
    %vm999 = vcmask 31744
    %v1000 = vsel %vm999, %v976, %v997
    %vm1001 = vcmask 39936
    %1002 = vst.msk [vmem:[%s11] sm:$0xff] %vm1001, %v1000
    // Predicated region
    $region54: #{_forward_impl.1} parent=1 // pred_check
      _
    $region55: #{_forward_impl.1} parent=1 // pred_check_branch
      %1004 = sbr.rel (0) target = $region57
    $region56: #{_forward_impl.1} parent=1 // pred_region
      _
    $region57: #{_forward_impl.1} parent=1 // pred_fallthru
      _
    // Predicated region
    $region58: #{_forward_impl.1} parent=1 // pred_check
      _
    $region59: #{_forward_impl.1} parent=1 // pred_check_branch
      %1006 = sbr.rel (0) target = $region61
    $region60: #{_forward_impl.1} parent=1 // pred_region
      _
    $region61: #{_forward_impl.1} parent=1 // pred_fallthru
      _
    %1007 = vsyncpa [#allocation4], 1
    %1008 = vsyncpa [#allocation6], 1

</llo_original>
